<compile_context>
chip_gen: v6e
topology: v6e:2x2x1
jax: 0.10.0
libtpu: 0.0.40
codegen_flags: <defaults>
</compile_context>

<pallas_src>
import jax
import jax.numpy as jnp
from jax.experimental import pallas as pl
from jax.experimental.pallas import tpu as pltpu


# ---------------------------------------------------------------------------
# One-time parameter repacking (do this at param-load time, NOT per decode step).
# ---------------------------------------------------------------------------
def pack_params(params, weight_dtype=jnp.float32):
    H = params["embedding"].shape[1]
    L = params["attn_W"].shape[0]
    O = params["out_W"].shape[0]
    wd = weight_dtype
    maxw = max(L, H, 3 * H, O)

    def pad_row(v):  # biases stay f32, padded into one (5, maxw) slab
        return jnp.pad(v.astype(jnp.float32), (0, maxw - v.shape[0]))

    return {
        "embedding": params["embedding"].astype(wd),                # (O, H)
        # cat-weights split at pack time: [emb;hid] @ W^T == emb@We + hid@Wh
        "attn_w_e": params["attn_W"][:, :H].T.astype(wd),           # (H, L)
        "attn_w_h": params["attn_W"][:, H:].T.astype(wd),           # (H, L)
        "comb_w_e": params["attn_combine_W"][:, :H].T.astype(wd),   # (H, H)
        "comb_w_a": params["attn_combine_W"][:, H:].T.astype(wd),   # (H, H)
        "w_ih":     params["gru_W_ih"].T.astype(wd),                # (H, 3H) gates r|z|n
        "w_hh":     params["gru_W_hh"].T.astype(wd),                # (H, 3H)
        "out_w":    params["out_W"].T.astype(wd),                   # (H, O)
        "bias":     jnp.stack([pad_row(params["attn_b"]),
                               pad_row(params["attn_combine_b"]),
                               pad_row(params["gru_b_ih"]),
                               pad_row(params["gru_b_hh"]),
                               pad_row(params["out_b"])], axis=0),  # (5, maxw) f32
    }


# ---------------------------------------------------------------------------
# In-kernel math for one decode step.  Weight refs are read as-is (bf16 or f32)
# and fed straight to the MXU; activations are f32 except a cheap (B,H) cast to
# the weight dtype right before each dot.
# ---------------------------------------------------------------------------
def _decoder_step_core(emb, hid, enc_ref,
                       wa_e_ref, wa_h_ref, wc_e_ref, wc_a_ref,
                       w_ih_ref, w_hh_ref, out_w_ref, bias_ref):
    f32 = jnp.float32
    wd = w_ih_ref.dtype                      # weight storage dtype (f32 or bf16)
    B, H = hid.shape
    L = wa_e_ref.shape[1]
    O = out_w_ref.shape[1]

    attn_b = bias_ref[0:1, :L]
    comb_b = bias_ref[1:2, :H]
    b_ih = bias_ref[2:3, :3 * H]
    b_hh = bias_ref[3:4, :3 * H]
    out_b = bias_ref[4:5, :O]

    hid_w = hid.astype(wd)                   # (B,H) down-cast only; weights untouched

    # ---- attention weights: softmax(emb@Wa_e + hid@Wa_h + b)  (no lane concat) ----
    attn_logits = (jnp.dot(emb, wa_e_ref[...], preferred_element_type=f32)
                   + jnp.dot(hid_w, wa_h_ref[...], preferred_element_type=f32)
                   + attn_b)
    m = jnp.max(attn_logits, axis=1, keepdims=True)
    e = jnp.exp(attn_logits - m)
    attn_weights = e * pl.reciprocal(jnp.sum(e, axis=1, keepdims=True), approx=True)

    # ---- attn_applied: weighted sum over encoder positions (native (L,B,H) layout,
    #      L VPU FMAs over (B,H) tiles; no bmm, no transpose, no XLU reduce) ----
    applied = jnp.zeros((B, H), f32)
    for l in range(enc_ref.shape[0]):
        applied = applied + attn_weights[:, l:l + 1] * enc_ref[l].astype(f32)

    # ---- attn_combine + ReLU (split dots instead of concat) ----
    x = (jnp.dot(emb, wc_e_ref[...], preferred_element_type=f32)
         + jnp.dot(applied.astype(wd), wc_a_ref[...], preferred_element_type=f32)
         + comb_b)
    x = jnp.maximum(x, 0.0)

    # ---- single-step GRU (PyTorch gate order r, z, n), fused (H,3H) dots ----
    gi = jnp.dot(x.astype(wd), w_ih_ref[...], preferred_element_type=f32) + b_ih
    gh = jnp.dot(hid_w, w_hh_ref[...], preferred_element_type=f32) + b_hh
    r = jax.nn.sigmoid(gi[:, :H] + gh[:, :H])
    z = jax.nn.sigmoid(gi[:, H:2 * H] + gh[:, H:2 * H])
    n = jnp.tanh(gi[:, 2 * H:] + r * gh[:, 2 * H:])
    h_new = (1.0 - z) * n + z * hid                                     # (B, H) f32

    # ---- output projection + log_softmax ----
    logits = jnp.dot(h_new.astype(wd), out_w_ref[...], preferred_element_type=f32) + out_b
    lm = jnp.max(logits, axis=1, keepdims=True)
    shifted = logits - lm
    logp = shifted - jnp.log(jnp.sum(jnp.exp(shifted), axis=1, keepdims=True))
    return logp, h_new, attn_weights


# ---------------------------------------------------------------------------
# Kernel: a block of decode steps per grid iteration.  Token ids live in SMEM
# (scalar prefetch); all weights / encoder outputs are whole-array VMEM residents
# (single-buffered, DMA'd once); the hidden state is carried in vregs inside a
# block and in a resident output block across blocks.
# ---------------------------------------------------------------------------
def attn_decoder_loop_kernel(ids_ref,                      # SMEM (T*B,) int32
                             emb_ref, hid0_ref, enc_ref,
                             wa_e_ref, wa_h_ref, wc_e_ref, wc_a_ref,
                             w_ih_ref, w_hh_ref, out_w_ref, bias_ref,
                             slab_ref, hcarry_ref):
    TB, B, slab_w = slab_ref.shape
    L = wa_e_ref.shape[1]
    O = out_w_ref.shape[1]
    tblk = pl.program_id(0)

    @pl.when(tblk == 0)
    def _():
        hcarry_ref[...] = hid0_ref[...].astype(hcarry_ref.dtype)

    hid = hcarry_ref[...]
    for tb in range(TB):                                   # unrolled time block
        t = tblk * TB + tb
        # embedding row gather: SMEM ids -> dynamic slice of the resident table
        rows = [emb_ref[pl.ds(ids_ref[t * B + b], 1), :] for b in range(B)]
        emb = jnp.concatenate(rows, axis=0)                # (B, H), weight dtype
        # TODO(synk): dropout(p=0.1) on `emb` is identity (inference mode).
        logp, hid, attw = _decoder_step_core(
            emb, hid, enc_ref, wa_e_ref, wa_h_ref, wc_e_ref, wc_a_ref,
            w_ih_ref, w_hh_ref, out_w_ref, bias_ref)
        # one lane-dense store: [logp | attn_weights | zero pad] into a 128k slab
        pad = slab_w - (O + L)
        parts = [logp, attw]
        if pad:
            parts.append(jnp.zeros((B, pad), jnp.float32))
        slab_ref[tb] = jnp.concatenate(parts, axis=1)
    hcarry_ref[...] = hid


# ---------------------------------------------------------------------------
# Teacher-forced decode loop (and the single-step forward as its T=1 case).
# ---------------------------------------------------------------------------
def attn_decoder_decode_loop(packed, input_ids_seq, hidden, encoder_outputs,
                             time_block=None):
    """input_ids_seq: (T, B) int; hidden: (1, B, H) or None; encoder_outputs: (L, B, H)."""
    emb_tbl = packed["embedding"]
    O, H = emb_tbl.shape
    L = packed["attn_w_e"].shape[1]
    T, B = input_ids_seq.shape
    if hidden is None:
        hidden = jnp.zeros((1, B, H), jnp.float32)
    hid0 = hidden[0].astype(jnp.float32)
    enc = encoder_outputs                                   # native (L, B, H), no transpose
    ids_flat = input_ids_seq.reshape(-1).astype(jnp.int32)  # (T*B,) -> SMEM scalar prefetch
    w_slab = ((O + L + 127) // 128) * 128

    if time_block is None:                                  # amortize ~600-cycle/step overhead
        time_block = next(tb for tb in range(min(8, T), 0, -1) if T % tb == 0)
    n_blocks = T // time_block

    residents = (emb_tbl, hid0, enc,
                 packed["attn_w_e"], packed["attn_w_h"],
                 packed["comb_w_e"], packed["comb_w_a"],
                 packed["w_ih"], packed["w_hh"], packed["out_w"], packed["bias"])

    # explicit VMEM budget: residents (single-buffered) + double-buffered output slabs
    resident_b = sum(int(a.size) * a.dtype.itemsize for a in residents)
    stream_b = 2 * (time_block * B * w_slab * 4) + 2 * (B * H * 4)
    vmem_limit = int(min(64 << 20, max(8 << 20, 2 * (resident_b + stream_b) + (2 << 20))))

    vmem = pl.BlockSpec(memory_space=pltpu.MemorySpace.VMEM)  # whole array, DMA'd once

    slab_seq, h_final = pl.pallas_call(
        attn_decoder_loop_kernel,
        grid_spec=pltpu.PrefetchScalarGridSpec(
            num_scalar_prefetch=1,
            grid=(n_blocks,),
            in_specs=[vmem] * len(residents),
            out_specs=(
                pl.BlockSpec((time_block, B, w_slab), lambda t, ids: (t, 0, 0)),
                pl.BlockSpec((B, H), lambda t, ids: (0, 0)),   # resident hidden carry
            ),
        ),
        out_shape=(jax.ShapeDtypeStruct((T, B, w_slab), jnp.float32),
                   jax.ShapeDtypeStruct((B, H), jnp.float32)),
        compiler_params=pltpu.CompilerParams(
            dimension_semantics=("arbitrary",),               # recurrence over time
            vmem_limit_bytes=vmem_limit),
    )(ids_flat, *residents)

    logps = slab_seq[:, :, :O]
    attws = slab_seq[:, :, O:O + L]
    return logps, h_final[None], attws


def attn_decoder_forward(packed, input_ids, hidden, encoder_outputs):
    """Single decode step: input_ids (1, B); hidden (1, B, H) or None; enc (L, B, H)."""
    logps, h_final, attws = attn_decoder_decode_loop(packed, input_ids, hidden,
                                                     encoder_outputs)
    return logps[0], h_final, attws[0]


# ---------------------------------------------------------------------------
# Pure-JAX reference of the PyTorch forward (eval mode).
# ---------------------------------------------------------------------------
def reference_forward(params, input_ids, hidden, encoder_outputs):
    H = params["embedding"].shape[1]
    emb = jnp.take(params["embedding"], input_ids[0], axis=0)
    hid = hidden[0]
    cat1 = jnp.concatenate([emb, hid], axis=1)
    attw = jax.nn.softmax(cat1 @ params["attn_W"].T + params["attn_b"], axis=1)
    enc = jnp.transpose(encoder_outputs, (1, 0, 2))
    applied = jnp.einsum("bl,blh->bh", attw, enc)
    cat2 = jnp.concatenate([emb, applied], axis=1)
    x = jnp.maximum(cat2 @ params["attn_combine_W"].T + params["attn_combine_b"], 0.0)
    gi = x @ params["gru_W_ih"].T + params["gru_b_ih"]
    gh = hid @ params["gru_W_hh"].T + params["gru_b_hh"]
    r = jax.nn.sigmoid(gi[:, :H] + gh[:, :H])
    z = jax.nn.sigmoid(gi[:, H:2 * H] + gh[:, H:2 * H])
    n = jnp.tanh(gi[:, 2 * H:] + r * gh[:, 2 * H:])
    h_new = (1.0 - z) * n + z * hid
    logits = h_new @ params["out_W"].T + params["out_b"]
    return jax.nn.log_softmax(logits, axis=1), h_new[None], attw


if __name__ == "__main__":
    H, O, L, B, T = 32, 16, 8, 2, 5    # hidden, vocab, max_length, batch, decode steps
    key = jax.random.PRNGKey(0)
    ks = jax.random.split(key, 13)

    def u(k, shape, bound):
        return jax.random.uniform(k, shape, jnp.float32, -bound, bound)

    kH = 1.0 / float(jnp.sqrt(H))
    k2H = 1.0 / float(jnp.sqrt(2 * H))
    params = {
        "embedding":      jax.random.normal(ks[0], (O, H), jnp.float32),
        "attn_W":         u(ks[1], (L, 2 * H), k2H),
        "attn_b":         u(ks[2], (L,), k2H),
        "attn_combine_W": u(ks[3], (H, 2 * H), k2H),
        "attn_combine_b": u(ks[4], (H,), k2H),
        "gru_W_ih":       u(ks[5], (3 * H, H), kH),
        "gru_W_hh":       u(ks[6], (3 * H, H), kH),
        "gru_b_ih":       u(ks[7], (3 * H,), kH),
        "gru_b_hh":       u(ks[8], (3 * H,), kH),
        "out_W":          u(ks[9], (O, H), kH),
        "out_b":          u(ks[10], (O,), kH),
    }
    input_ids = jax.random.randint(ks[11], (1, B), 0, O, jnp.int32)
    ids_seq = jax.random.randint(ks[12], (T, B), 0, O, jnp.int32)
    hidden = jax.random.normal(jax.random.PRNGKey(1), (1, B, H), jnp.float32)
    encoder_outputs = jax.random.normal(jax.random.PRNGKey(2), (L, B, H), jnp.float32)

    packed = pack_params(params)                          # one-time repack (f32)
    step_fn = jax.jit(attn_decoder_forward)
    loop_fn = jax.jit(attn_decoder_decode_loop)

    # ---- single decode step (loop kernel with T=1) ----
    # Tolerances: approx-EUP reciprocal in the attention softmax (per review).
    logp, new_h, attw = step_fn(packed, input_ids, hidden, encoder_outputs)
    jax.block_until_ready((logp, new_h, attw))
    r_logp, r_h, r_attw = reference_forward(params, input_ids, hidden, encoder_outputs)
    assert jnp.allclose(logp, r_logp, atol=5e-3, rtol=5e-3)
    assert jnp.allclose(new_h, r_h, atol=5e-3, rtol=5e-3)
    assert jnp.allclose(attw, r_attw, atol=5e-3, rtol=5e-3)

    # ---- multi-step teacher-forced decode loop (time-blocked, weights resident) ----
    logps, h_fin, attws = loop_fn(packed, ids_seq, hidden, encoder_outputs)
    jax.block_until_ready((logps, h_fin, attws))
    h = hidden
    for t in range(T):
        r_lp, h, r_aw = reference_forward(params, ids_seq[t:t + 1], h, encoder_outputs)
        assert jnp.allclose(logps[t], r_lp, atol=1e-2, rtol=1e-2)
        assert jnp.allclose(attws[t], r_aw, atol=1e-2, rtol=1e-2)
    assert jnp.allclose(h_fin, h, atol=1e-2, rtol=1e-2)

    # ---- bf16 weight storage (bf16 operands go straight to the MXU) ----
    packed_bf16 = pack_params(params, weight_dtype=jnp.bfloat16)
    logp_b, h_b, attw_b = step_fn(packed_bf16, input_ids, hidden, encoder_outputs)
    jax.block_until_ready((logp_b, h_b, attw_b))
    weight_keys = ("embedding", "attn_W", "attn_combine_W", "gru_W_ih", "gru_W_hh", "out_W")
    params_q = {k: (v.astype(jnp.bfloat16).astype(jnp.float32) if k in weight_keys else v)
                for k, v in params.items()}
    q_logp, q_h, q_attw = reference_forward(params_q, input_ids, hidden, encoder_outputs)
    assert jnp.allclose(logp_b, q_logp, atol=5e-2, rtol=5e-2)
    assert jnp.allclose(h_b, q_h, atol=5e-2, rtol=5e-2)
    assert jnp.allclose(attw_b, q_attw, atol=5e-2, rtol=5e-2)

    print("KERNEL_OK")
</pallas_src>

<mosaic_0001>
module attributes {stable_mosaic.version = 11 : i64} {
  func.func @attn_decoder_loop_kernel(%arg0: i32, %arg1: memref<2xi32, #tpu.memory_space<smem>>, %arg2: memref<16x32xf32, #tpu.memory_space<vmem>>, %arg3: memref<2x32xf32, #tpu.memory_space<vmem>>, %arg4: memref<8x2x32xf32, #tpu.memory_space<vmem>>, %arg5: memref<32x8xf32, #tpu.memory_space<vmem>>, %arg6: memref<32x8xf32, #tpu.memory_space<vmem>>, %arg7: memref<32x32xf32, #tpu.memory_space<vmem>>, %arg8: memref<32x32xf32, #tpu.memory_space<vmem>>, %arg9: memref<32x96xf32, #tpu.memory_space<vmem>>, %arg10: memref<32x96xf32, #tpu.memory_space<vmem>>, %arg11: memref<32x16xf32, #tpu.memory_space<vmem>>, %arg12: memref<5x96xf32, #tpu.memory_space<vmem>>, %arg13: memref<1x2x128xf32, #tpu.memory_space<vmem>>, %arg14: memref<2x32xf32, #tpu.memory_space<vmem>>) attributes {dimension_semantics = [#tpu.dimension_semantics<arbitrary>], iteration_bounds = array<i64: 1>, scalar_prefetch = 1 : i64, scratch_operands = 0 : i64, tpu.core_type = #tpu.core_type<tc>, window_params = [{pipeline_mode = #tpu.pipeline_mode<synchronous>, transform_indices = @transform_0, window_bounds = array<i64: 16, 32>}, {pipeline_mode = #tpu.pipeline_mode<synchronous>, transform_indices = @transform_1, window_bounds = array<i64: 2, 32>}, {pipeline_mode = #tpu.pipeline_mode<synchronous>, transform_indices = @transform_2, window_bounds = array<i64: 8, 2, 32>}, {pipeline_mode = #tpu.pipeline_mode<synchronous>, transform_indices = @transform_3, window_bounds = array<i64: 32, 8>}, {pipeline_mode = #tpu.pipeline_mode<synchronous>, transform_indices = @transform_4, window_bounds = array<i64: 32, 8>}, {pipeline_mode = #tpu.pipeline_mode<synchronous>, transform_indices = @transform_5, window_bounds = array<i64: 32, 32>}, {pipeline_mode = #tpu.pipeline_mode<synchronous>, transform_indices = @transform_6, window_bounds = array<i64: 32, 32>}, {pipeline_mode = #tpu.pipeline_mode<synchronous>, transform_indices = @transform_7, window_bounds = array<i64: 32, 96>}, {pipeline_mode = #tpu.pipeline_mode<synchronous>, transform_indices = @transform_8, window_bounds = array<i64: 32, 96>}, {pipeline_mode = #tpu.pipeline_mode<synchronous>, transform_indices = @transform_9, window_bounds = array<i64: 32, 16>}, {pipeline_mode = #tpu.pipeline_mode<synchronous>, transform_indices = @transform_10, window_bounds = array<i64: 5, 96>}, {transform_indices = @transform_11, window_bounds = array<i64: 1, 2, 128>}, {pipeline_mode = #tpu.pipeline_mode<synchronous>, transform_indices = @transform_12, window_bounds = array<i64: 2, 32>}]} {
    %c0_i32 = arith.constant 0 : i32
    %0 = arith.cmpi eq, %arg0, %c0_i32 : i32
    %1 = arith.extui %0 : i1 to i32
    %c0_i32_0 = arith.constant 0 : i32
    %2 = arith.cmpi ne, %1, %c0_i32_0 : i32
    scf.if %2 {
      %c0_70 = arith.constant 0 : index
      %c0_71 = arith.constant 0 : index
      %153 = vector.load %arg3[%c0_70, %c0_71] : memref<2x32xf32, #tpu.memory_space<vmem>>, vector<2x32xf32>
      %c0_72 = arith.constant 0 : index
      %c0_73 = arith.constant 0 : index
      %154 = vector.load %arg14[%c0_72, %c0_73] : memref<2x32xf32, #tpu.memory_space<vmem>>, vector<2x32xf32>
      tpu.vector_store %arg14[%c0_72, %c0_73], %153 {strides = array<i32>} : memref<2x32xf32, #tpu.memory_space<vmem>>, vector<2x32xf32>,
    } else {
    }
    %c0 = arith.constant 0 : index
    %c0_1 = arith.constant 0 : index
    %3 = vector.load %arg14[%c0, %c0_1] : memref<2x32xf32, #tpu.memory_space<vmem>>, vector<2x32xf32>
    %c1_i32 = arith.constant 1 : i32
    %4 = arith.muli %arg0, %c1_i32 : i32
    %c0_i32_2 = arith.constant 0 : i32
    %5 = arith.addi %4, %c0_i32_2 : i32
    %c2_i32 = arith.constant 2 : i32
    %6 = arith.muli %5, %c2_i32 : i32
    %c0_i32_3 = arith.constant 0 : i32
    %7 = arith.addi %6, %c0_i32_3 : i32
    %8 = arith.index_cast %7 : i32 to index
    %9 = memref.load %arg1[%8] : memref<2xi32, #tpu.memory_space<smem>>
    %10 = arith.index_cast %9 : i32 to index
    %c0_4 = arith.constant 0 : index
    %11 = vector.load %arg2[%10, %c0_4] : memref<16x32xf32, #tpu.memory_space<vmem>>, vector<1x32xf32>
    %c2_i32_5 = arith.constant 2 : i32
    %12 = arith.muli %5, %c2_i32_5 : i32
    %c1_i32_6 = arith.constant 1 : i32
    %13 = arith.addi %12, %c1_i32_6 : i32
    %14 = arith.index_cast %13 : i32 to index
    %15 = memref.load %arg1[%14] : memref<2xi32, #tpu.memory_space<smem>>
    %16 = arith.index_cast %15 : i32 to index
    %c0_7 = arith.constant 0 : index
    %17 = vector.load %arg2[%16, %c0_7] : memref<16x32xf32, #tpu.memory_space<vmem>>, vector<1x32xf32>
    %18 = tpu.concatenate %11, %17 in 0 : vector<1x32xf32>, vector<1x32xf32> -> vector<2x32xf32>
    %c0_8 = arith.constant 0 : index
    %c0_9 = arith.constant 0 : index
    %19 = vector.load %arg12[%c0_8, %c0_9] : memref<5x96xf32, #tpu.memory_space<vmem>>, vector<1x8xf32>
    %c1 = arith.constant 1 : index
    %c0_10 = arith.constant 0 : index
    %20 = vector.load %arg12[%c1, %c0_10] : memref<5x96xf32, #tpu.memory_space<vmem>>, vector<1x32xf32>
    %c2 = arith.constant 2 : index
    %c0_11 = arith.constant 0 : index
    %21 = vector.load %arg12[%c2, %c0_11] : memref<5x96xf32, #tpu.memory_space<vmem>>, vector<1x96xf32>
    %c3 = arith.constant 3 : index
    %c0_12 = arith.constant 0 : index
    %22 = vector.load %arg12[%c3, %c0_12] : memref<5x96xf32, #tpu.memory_space<vmem>>, vector<1x96xf32>
    %c4 = arith.constant 4 : index
    %c0_13 = arith.constant 0 : index
    %23 = vector.load %arg12[%c4, %c0_13] : memref<5x96xf32, #tpu.memory_space<vmem>>, vector<1x16xf32>
    %c0_14 = arith.constant 0 : index
    %c0_15 = arith.constant 0 : index
    %24 = vector.load %arg5[%c0_14, %c0_15] : memref<32x8xf32, #tpu.memory_space<vmem>>, vector<32x8xf32>
    %cst = arith.constant dense<0.000000e+00> : vector<2x8xf32>
    %25 = tpu.matmul %18, %24, %cst {dimension_numbers = #tpu.dot_dimension_numbers<[1], [0], [0], [1], [0, 0, 1, 1], [], []>} : vector<2x32xf32>, vector<32x8xf32>, vector<2x8xf32> -> vector<2x8xf32>
    %c0_16 = arith.constant 0 : index
    %c0_17 = arith.constant 0 : index
    %26 = vector.load %arg6[%c0_16, %c0_17] : memref<32x8xf32, #tpu.memory_space<vmem>>, vector<32x8xf32>
    %cst_18 = arith.constant dense<0.000000e+00> : vector<2x8xf32>
    %27 = tpu.matmul %3, %26, %cst_18 {dimension_numbers = #tpu.dot_dimension_numbers<[1], [0], [0], [1], [0, 0, 1, 1], [], []>} : vector<2x32xf32>, vector<32x8xf32>, vector<2x8xf32> -> vector<2x8xf32>
    %28 = arith.addf %25, %27 : vector<2x8xf32>
    %29 = vector.broadcast %19 : vector<1x8xf32> to vector<2x8xf32>
    %30 = arith.addf %28, %29 : vector<2x8xf32>
    %cst_19 = arith.constant dense<0xFF800000> : vector<2xf32>
    %31 = vector.multi_reduction <maximumf>, %30, %cst_19 [1] : vector<2x8xf32> to vector<2xf32>
    %32 = vector.shape_cast %31 : vector<2xf32> to vector<2x1xf32>
    %33 = vector.broadcast %32 : vector<2x1xf32> to vector<2x8xf32>
    %34 = arith.subf %30, %33 : vector<2x8xf32>
    %35 = math.exp %34 : vector<2x8xf32>
    %cst_20 = arith.constant dense<0.000000e+00> : vector<2xf32>
    %36 = vector.multi_reduction <add>, %35, %cst_20 [1] : vector<2x8xf32> to vector<2xf32>
    %37 = vector.shape_cast %36 : vector<2xf32> to vector<2x1xf32>
    %38 = tpu.reciprocal %37 {approx = true} : vector<2x1xf32> -> vector<2x1xf32>
    %39 = vector.broadcast %38 : vector<2x1xf32> to vector<2x8xf32>
    %40 = arith.mulf %35, %39 : vector<2x8xf32>
    %cst_21 = arith.constant 0.000000e+00 : f32
    %41 = vector.broadcast %cst_21 : f32 to vector<2x32xf32>
    %42 = vector.extract_strided_slice %40 {offsets = [0, 0], sizes = [2, 1], strides = [1, 1]} : vector<2x8xf32> to vector<2x1xf32>
    %c0_22 = arith.constant 0 : index
    %c0_23 = arith.constant 0 : index
    %c0_24 = arith.constant 0 : index
    %43 = vector.load %arg4[%c0_22, %c0_23, %c0_24] : memref<8x2x32xf32, #tpu.memory_space<vmem>>, vector<1x2x32xf32>
    %44 = vector.shape_cast %43 : vector<1x2x32xf32> to vector<2x32xf32>
    %45 = vector.broadcast %42 : vector<2x1xf32> to vector<2x32xf32>
    %46 = arith.mulf %45, %44 : vector<2x32xf32>
    %47 = arith.addf %41, %46 : vector<2x32xf32>
    %48 = vector.extract_strided_slice %40 {offsets = [0, 1], sizes = [2, 1], strides = [1, 1]} : vector<2x8xf32> to vector<2x1xf32>
    %c1_25 = arith.constant 1 : index
    %c0_26 = arith.constant 0 : index
    %c0_27 = arith.constant 0 : index
    %49 = vector.load %arg4[%c1_25, %c0_26, %c0_27] : memref<8x2x32xf32, #tpu.memory_space<vmem>>, vector<1x2x32xf32>
    %50 = vector.shape_cast %49 : vector<1x2x32xf32> to vector<2x32xf32>
    %51 = vector.broadcast %48 : vector<2x1xf32> to vector<2x32xf32>
    %52 = arith.mulf %51, %50 : vector<2x32xf32>
    %53 = arith.addf %47, %52 : vector<2x32xf32>
    %54 = vector.extract_strided_slice %40 {offsets = [0, 2], sizes = [2, 1], strides = [1, 1]} : vector<2x8xf32> to vector<2x1xf32>
    %c2_28 = arith.constant 2 : index
    %c0_29 = arith.constant 0 : index
    %c0_30 = arith.constant 0 : index
    %55 = vector.load %arg4[%c2_28, %c0_29, %c0_30] : memref<8x2x32xf32, #tpu.memory_space<vmem>>, vector<1x2x32xf32>
    %56 = vector.shape_cast %55 : vector<1x2x32xf32> to vector<2x32xf32>
    %57 = vector.broadcast %54 : vector<2x1xf32> to vector<2x32xf32>
    %58 = arith.mulf %57, %56 : vector<2x32xf32>
    %59 = arith.addf %53, %58 : vector<2x32xf32>
    %60 = vector.extract_strided_slice %40 {offsets = [0, 3], sizes = [2, 1], strides = [1, 1]} : vector<2x8xf32> to vector<2x1xf32>
    %c3_31 = arith.constant 3 : index
    %c0_32 = arith.constant 0 : index
    %c0_33 = arith.constant 0 : index
    %61 = vector.load %arg4[%c3_31, %c0_32, %c0_33] : memref<8x2x32xf32, #tpu.memory_space<vmem>>, vector<1x2x32xf32>
    %62 = vector.shape_cast %61 : vector<1x2x32xf32> to vector<2x32xf32>
    %63 = vector.broadcast %60 : vector<2x1xf32> to vector<2x32xf32>
    %64 = arith.mulf %63, %62 : vector<2x32xf32>
    %65 = arith.addf %59, %64 : vector<2x32xf32>
    %66 = vector.extract_strided_slice %40 {offsets = [0, 4], sizes = [2, 1], strides = [1, 1]} : vector<2x8xf32> to vector<2x1xf32>
    %c4_34 = arith.constant 4 : index
    %c0_35 = arith.constant 0 : index
    %c0_36 = arith.constant 0 : index
    %67 = vector.load %arg4[%c4_34, %c0_35, %c0_36] : memref<8x2x32xf32, #tpu.memory_space<vmem>>, vector<1x2x32xf32>
    %68 = vector.shape_cast %67 : vector<1x2x32xf32> to vector<2x32xf32>
    %69 = vector.broadcast %66 : vector<2x1xf32> to vector<2x32xf32>
    %70 = arith.mulf %69, %68 : vector<2x32xf32>
    %71 = arith.addf %65, %70 : vector<2x32xf32>
    %72 = vector.extract_strided_slice %40 {offsets = [0, 5], sizes = [2, 1], strides = [1, 1]} : vector<2x8xf32> to vector<2x1xf32>
    %c5 = arith.constant 5 : index
    %c0_37 = arith.constant 0 : index
    %c0_38 = arith.constant 0 : index
    %73 = vector.load %arg4[%c5, %c0_37, %c0_38] : memref<8x2x32xf32, #tpu.memory_space<vmem>>, vector<1x2x32xf32>
    %74 = vector.shape_cast %73 : vector<1x2x32xf32> to vector<2x32xf32>
    %75 = vector.broadcast %72 : vector<2x1xf32> to vector<2x32xf32>
    %76 = arith.mulf %75, %74 : vector<2x32xf32>
    %77 = arith.addf %71, %76 : vector<2x32xf32>
    %78 = vector.extract_strided_slice %40 {offsets = [0, 6], sizes = [2, 1], strides = [1, 1]} : vector<2x8xf32> to vector<2x1xf32>
    %c6 = arith.constant 6 : index
    %c0_39 = arith.constant 0 : index
    %c0_40 = arith.constant 0 : index
    %79 = vector.load %arg4[%c6, %c0_39, %c0_40] : memref<8x2x32xf32, #tpu.memory_space<vmem>>, vector<1x2x32xf32>
    %80 = vector.shape_cast %79 : vector<1x2x32xf32> to vector<2x32xf32>
    %81 = vector.broadcast %78 : vector<2x1xf32> to vector<2x32xf32>
    %82 = arith.mulf %81, %80 : vector<2x32xf32>
    %83 = arith.addf %77, %82 : vector<2x32xf32>
    %84 = vector.extract_strided_slice %40 {offsets = [0, 7], sizes = [2, 1], strides = [1, 1]} : vector<2x8xf32> to vector<2x1xf32>
    %c7 = arith.constant 7 : index
    %c0_41 = arith.constant 0 : index
    %c0_42 = arith.constant 0 : index
    %85 = vector.load %arg4[%c7, %c0_41, %c0_42] : memref<8x2x32xf32, #tpu.memory_space<vmem>>, vector<1x2x32xf32>
    %86 = vector.shape_cast %85 : vector<1x2x32xf32> to vector<2x32xf32>
    %87 = vector.broadcast %84 : vector<2x1xf32> to vector<2x32xf32>
    %88 = arith.mulf %87, %86 : vector<2x32xf32>
    %89 = arith.addf %83, %88 : vector<2x32xf32>
    %c0_43 = arith.constant 0 : index
    %c0_44 = arith.constant 0 : index
    %90 = vector.load %arg7[%c0_43, %c0_44] : memref<32x32xf32, #tpu.memory_space<vmem>>, vector<32x32xf32>
    %cst_45 = arith.constant dense<0.000000e+00> : vector<2x32xf32>
    %91 = tpu.matmul %18, %90, %cst_45 {dimension_numbers = #tpu.dot_dimension_numbers<[1], [0], [0], [1], [0, 0, 1, 1], [], []>} : vector<2x32xf32>, vector<32x32xf32>, vector<2x32xf32> -> vector<2x32xf32>
    %c0_46 = arith.constant 0 : index
    %c0_47 = arith.constant 0 : index
    %92 = vector.load %arg8[%c0_46, %c0_47] : memref<32x32xf32, #tpu.memory_space<vmem>>, vector<32x32xf32>
    %cst_48 = arith.constant dense<0.000000e+00> : vector<2x32xf32>
    %93 = tpu.matmul %89, %92, %cst_48 {dimension_numbers = #tpu.dot_dimension_numbers<[1], [0], [0], [1], [0, 0, 1, 1], [], []>} : vector<2x32xf32>, vector<32x32xf32>, vector<2x32xf32> -> vector<2x32xf32>
    %94 = arith.addf %91, %93 : vector<2x32xf32>
    %95 = vector.broadcast %20 : vector<1x32xf32> to vector<2x32xf32>
    %96 = arith.addf %94, %95 : vector<2x32xf32>
    %cst_49 = arith.constant 0.000000e+00 : f32
    %97 = vector.broadcast %cst_49 : f32 to vector<2x32xf32>
    %98 = arith.maximumf %96, %97 : vector<2x32xf32>
    %c0_50 = arith.constant 0 : index
    %c0_51 = arith.constant 0 : index
    %99 = vector.load %arg9[%c0_50, %c0_51] : memref<32x96xf32, #tpu.memory_space<vmem>>, vector<32x96xf32>
    %cst_52 = arith.constant dense<0.000000e+00> : vector<2x96xf32>
    %100 = tpu.matmul %98, %99, %cst_52 {dimension_numbers = #tpu.dot_dimension_numbers<[1], [0], [0], [1], [0, 0, 1, 1], [], []>} : vector<2x32xf32>, vector<32x96xf32>, vector<2x96xf32> -> vector<2x96xf32>
    %101 = vector.broadcast %21 : vector<1x96xf32> to vector<2x96xf32>
    %102 = arith.addf %100, %101 : vector<2x96xf32>
    %c0_53 = arith.constant 0 : index
    %c0_54 = arith.constant 0 : index
    %103 = vector.load %arg10[%c0_53, %c0_54] : memref<32x96xf32, #tpu.memory_space<vmem>>, vector<32x96xf32>
    %cst_55 = arith.constant dense<0.000000e+00> : vector<2x96xf32>
    %104 = tpu.matmul %3, %103, %cst_55 {dimension_numbers = #tpu.dot_dimension_numbers<[1], [0], [0], [1], [0, 0, 1, 1], [], []>} : vector<2x32xf32>, vector<32x96xf32>, vector<2x96xf32> -> vector<2x96xf32>
    %105 = vector.broadcast %22 : vector<1x96xf32> to vector<2x96xf32>
    %106 = arith.addf %104, %105 : vector<2x96xf32>
    %107 = vector.extract_strided_slice %102 {offsets = [0, 0], sizes = [2, 32], strides = [1, 1]} : vector<2x96xf32> to vector<2x32xf32>
    %108 = vector.extract_strided_slice %106 {offsets = [0, 0], sizes = [2, 32], strides = [1, 1]} : vector<2x96xf32> to vector<2x32xf32>
    %109 = arith.addf %107, %108 : vector<2x32xf32>
    %110 = arith.negf %109 : vector<2x32xf32>
    %111 = math.exp %110 : vector<2x32xf32>
    %cst_56 = arith.constant 1.000000e+00 : f32
    %112 = vector.broadcast %cst_56 : f32 to vector<2x32xf32>
    %113 = arith.addf %112, %111 : vector<2x32xf32>
    %114 = arith.divf %112, %113 : vector<2x32xf32>
    %115 = vector.extract_strided_slice %102 {offsets = [0, 32], sizes = [2, 32], strides = [1, 1]} : vector<2x96xf32> to vector<2x32xf32>
    %116 = vector.extract_strided_slice %106 {offsets = [0, 32], sizes = [2, 32], strides = [1, 1]} : vector<2x96xf32> to vector<2x32xf32>
    %117 = arith.addf %115, %116 : vector<2x32xf32>
    %118 = arith.negf %117 : vector<2x32xf32>
    %119 = math.exp %118 : vector<2x32xf32>
    %cst_57 = arith.constant 1.000000e+00 : f32
    %120 = vector.broadcast %cst_57 : f32 to vector<2x32xf32>
    %121 = arith.addf %120, %119 : vector<2x32xf32>
    %122 = arith.divf %120, %121 : vector<2x32xf32>
    %123 = vector.extract_strided_slice %102 {offsets = [0, 64], sizes = [2, 32], strides = [1, 1]} : vector<2x96xf32> to vector<2x32xf32>
    %124 = vector.extract_strided_slice %106 {offsets = [0, 64], sizes = [2, 32], strides = [1, 1]} : vector<2x96xf32> to vector<2x32xf32>
    %125 = arith.mulf %114, %124 : vector<2x32xf32>
    %126 = arith.addf %123, %125 : vector<2x32xf32>
    %127 = math.tanh %126 : vector<2x32xf32>
    %cst_58 = arith.constant 1.000000e+00 : f32
    %128 = vector.broadcast %cst_58 : f32 to vector<2x32xf32>
    %129 = arith.subf %128, %122 : vector<2x32xf32>
    %130 = arith.mulf %129, %127 : vector<2x32xf32>
    %131 = arith.mulf %122, %3 : vector<2x32xf32>
    %132 = arith.addf %130, %131 : vector<2x32xf32>
    %c0_59 = arith.constant 0 : index
    %c0_60 = arith.constant 0 : index
    %133 = vector.load %arg11[%c0_59, %c0_60] : memref<32x16xf32, #tpu.memory_space<vmem>>, vector<32x16xf32>
    %cst_61 = arith.constant dense<0.000000e+00> : vector<2x16xf32>
    %134 = tpu.matmul %132, %133, %cst_61 {dimension_numbers = #tpu.dot_dimension_numbers<[1], [0], [0], [1], [0, 0, 1, 1], [], []>} : vector<2x32xf32>, vector<32x16xf32>, vector<2x16xf32> -> vector<2x16xf32>
    %135 = vector.broadcast %23 : vector<1x16xf32> to vector<2x16xf32>
    %136 = arith.addf %134, %135 : vector<2x16xf32>
    %cst_62 = arith.constant dense<0xFF800000> : vector<2xf32>
    %137 = vector.multi_reduction <maximumf>, %136, %cst_62 [1] : vector<2x16xf32> to vector<2xf32>
    %138 = vector.shape_cast %137 : vector<2xf32> to vector<2x1xf32>
    %139 = vector.broadcast %138 : vector<2x1xf32> to vector<2x16xf32>
    %140 = arith.subf %136, %139 : vector<2x16xf32>
    %141 = math.exp %140 : vector<2x16xf32>
    %cst_63 = arith.constant dense<0.000000e+00> : vector<2xf32>
    %142 = vector.multi_reduction <add>, %141, %cst_63 [1] : vector<2x16xf32> to vector<2xf32>
    %143 = vector.shape_cast %142 : vector<2xf32> to vector<2x1xf32>
    %144 = math.log %143 : vector<2x1xf32>
    %145 = vector.broadcast %144 : vector<2x1xf32> to vector<2x16xf32>
    %146 = arith.subf %140, %145 : vector<2x16xf32>
    %cst_64 = arith.constant 0.000000e+00 : f32
    %147 = vector.broadcast %cst_64 : f32 to vector<2x104xf32>
    %148 = tpu.concatenate %146, %40, %147 in 1 : vector<2x16xf32>, vector<2x8xf32>, vector<2x104xf32> -> vector<2x128xf32>
    %c0_65 = arith.constant 0 : index
    %c0_66 = arith.constant 0 : index
    %c0_67 = arith.constant 0 : index
    %149 = vector.load %arg13[%c0_65, %c0_66, %c0_67] : memref<1x2x128xf32, #tpu.memory_space<vmem>>, vector<1x2x128xf32>
    %150 = vector.shape_cast %149 : vector<1x2x128xf32> to vector<2x128xf32>
    %151 = vector.shape_cast %148 : vector<2x128xf32> to vector<1x2x128xf32>
    tpu.vector_store %arg13[%c0_65, %c0_66, %c0_67], %151 {strides = array<i32>} : memref<1x2x128xf32, #tpu.memory_space<vmem>>, vector<1x2x128xf32>,
    %c0_68 = arith.constant 0 : index
    %c0_69 = arith.constant 0 : index
    %152 = vector.load %arg14[%c0_68, %c0_69] : memref<2x32xf32, #tpu.memory_space<vmem>>, vector<2x32xf32>
    tpu.vector_store %arg14[%c0_68, %c0_69], %132 {strides = array<i32>} : memref<2x32xf32, #tpu.memory_space<vmem>>, vector<2x32xf32>,
    return
  }
  func.func @transform_0(%arg0: i32, %arg1: memref<2xi32, #tpu.memory_space<smem>>) -> (i32, i32) {
    %c0_i32 = arith.constant 0 : i32
    %c0_i32_0 = arith.constant 0 : i32
    %c0_i32_1 = arith.constant 0 : i32
    return %c0_i32, %c0_i32_0 : i32, i32
  }
  func.func @transform_1(%arg0: i32, %arg1: memref<2xi32, #tpu.memory_space<smem>>) -> (i32, i32) {
    %c0_i32 = arith.constant 0 : i32
    %c0_i32_0 = arith.constant 0 : i32
    %c0_i32_1 = arith.constant 0 : i32
    return %c0_i32, %c0_i32_0 : i32, i32
  }
  func.func @transform_2(%arg0: i32, %arg1: memref<2xi32, #tpu.memory_space<smem>>) -> (i32, i32, i32) {
    %c0_i32 = arith.constant 0 : i32
    %c0_i32_0 = arith.constant 0 : i32
    %c0_i32_1 = arith.constant 0 : i32
    %c0_i32_2 = arith.constant 0 : i32
    return %c0_i32, %c0_i32_0, %c0_i32_1 : i32, i32, i32
  }
  func.func @transform_3(%arg0: i32, %arg1: memref<2xi32, #tpu.memory_space<smem>>) -> (i32, i32) {
    %c0_i32 = arith.constant 0 : i32
    %c0_i32_0 = arith.constant 0 : i32
    %c0_i32_1 = arith.constant 0 : i32
    return %c0_i32, %c0_i32_0 : i32, i32
  }
  func.func @transform_4(%arg0: i32, %arg1: memref<2xi32, #tpu.memory_space<smem>>) -> (i32, i32) {
    %c0_i32 = arith.constant 0 : i32
    %c0_i32_0 = arith.constant 0 : i32
    %c0_i32_1 = arith.constant 0 : i32
    return %c0_i32, %c0_i32_0 : i32, i32
  }
  func.func @transform_5(%arg0: i32, %arg1: memref<2xi32, #tpu.memory_space<smem>>) -> (i32, i32) {
    %c0_i32 = arith.constant 0 : i32
    %c0_i32_0 = arith.constant 0 : i32
    %c0_i32_1 = arith.constant 0 : i32
    return %c0_i32, %c0_i32_0 : i32, i32
  }
  func.func @transform_6(%arg0: i32, %arg1: memref<2xi32, #tpu.memory_space<smem>>) -> (i32, i32) {
    %c0_i32 = arith.constant 0 : i32
    %c0_i32_0 = arith.constant 0 : i32
    %c0_i32_1 = arith.constant 0 : i32
    return %c0_i32, %c0_i32_0 : i32, i32
  }
  func.func @transform_7(%arg0: i32, %arg1: memref<2xi32, #tpu.memory_space<smem>>) -> (i32, i32) {
    %c0_i32 = arith.constant 0 : i32
    %c0_i32_0 = arith.constant 0 : i32
    %c0_i32_1 = arith.constant 0 : i32
    return %c0_i32, %c0_i32_0 : i32, i32
  }
  func.func @transform_8(%arg0: i32, %arg1: memref<2xi32, #tpu.memory_space<smem>>) -> (i32, i32) {
    %c0_i32 = arith.constant 0 : i32
    %c0_i32_0 = arith.constant 0 : i32
    %c0_i32_1 = arith.constant 0 : i32
    return %c0_i32, %c0_i32_0 : i32, i32
  }
  func.func @transform_9(%arg0: i32, %arg1: memref<2xi32, #tpu.memory_space<smem>>) -> (i32, i32) {
    %c0_i32 = arith.constant 0 : i32
    %c0_i32_0 = arith.constant 0 : i32
    %c0_i32_1 = arith.constant 0 : i32
    return %c0_i32, %c0_i32_0 : i32, i32
  }
  func.func @transform_10(%arg0: i32, %arg1: memref<2xi32, #tpu.memory_space<smem>>) -> (i32, i32) {
    %c0_i32 = arith.constant 0 : i32
    %c0_i32_0 = arith.constant 0 : i32
    %c0_i32_1 = arith.constant 0 : i32
    return %c0_i32, %c0_i32_0 : i32, i32
  }
  func.func @transform_11(%arg0: i32, %arg1: memref<2xi32, #tpu.memory_space<smem>>) -> (i32, i32, i32) {
    %c0_i32 = arith.constant 0 : i32
    %c0_i32_0 = arith.constant 0 : i32
    %c0_i32_1 = arith.constant 0 : i32
    return %arg0, %c0_i32, %c0_i32_0 : i32, i32, i32
  }
  func.func @transform_12(%arg0: i32, %arg1: memref<2xi32, #tpu.memory_space<smem>>) -> (i32, i32) {
    %c0_i32 = arith.constant 0 : i32
    %c0_i32_0 = arith.constant 0 : i32
    %c0_i32_1 = arith.constant 0 : i32
    return %c0_i32, %c0_i32_0 : i32, i32
  }
}

</mosaic_0001>

<llo_original>
// kernel: attn_decoder_forward.1
$region0: #{attn_decoder_forward.1}
  #allocation0 [shape = 'u32[]', space=smem, size = 0x4, offset = 0x4, fixed_abs, tag = 'smem constant byte address 0x4 - core index']
  #allocation1 [shape = 'u32[144,128]{1,0:T(1,128)}', space=vmem, size = 0x12000, scoped, tag = 'internal scratch']
  #allocation2 [shape = 's32[1]{0}', space=sflag, size = 0x4, scoped, tag = 'scoped memory for attn_decoder_forward.1']
  #allocation3 [shape = 'u8[512]{0}', space=smem, size = 0x200, scoped, tag = 'prefetched SMEM operand 0']
  %s0 = inlined_call_operand.vmem [shape: s32[2], index: 0, kind: input, shape index: {}]
  %s1 = inlined_call_operand.hbm [shape: f32[16,32], index: 1, kind: input, shape index: {}]
  %s2 = inlined_call_operand.vmem [shape: f32[2,32], index: 2, kind: input, shape index: {}]
  %s3 = inlined_call_operand.vmem [shape: f32[8,2,32], index: 3, kind: input, shape index: {}]
  %s4 = inlined_call_operand.vmem [shape: f32[32,8], index: 4, kind: input, shape index: {}]
  %s5 = inlined_call_operand.vmem [shape: f32[32,8], index: 5, kind: input, shape index: {}]
  %s6 = inlined_call_operand.vmem [shape: f32[32,32], index: 6, kind: input, shape index: {}]
  %s7 = inlined_call_operand.vmem [shape: f32[32,32], index: 7, kind: input, shape index: {}]
  %s8 = inlined_call_operand.vmem [shape: f32[32,96], index: 8, kind: input, shape index: {}]
  %s9 = inlined_call_operand.vmem [shape: f32[32,96], index: 9, kind: input, shape index: {}]
  %s10 = inlined_call_operand.vmem [shape: f32[32,16], index: 10, kind: input, shape index: {}]
  %s11 = inlined_call_operand.hbm [shape: f32[5,96], index: 11, kind: input, shape index: {}]
  %s12 = inlined_call_operand.vmem [shape: f32[1,2,128], index: 12, kind: output, shape index: {0}]
  %s13 = inlined_call_operand.hbm [shape: f32[2,32], index: 13, kind: output, shape index: {1}]
  %14 = xla_tuple %s12, %s13
  %s15 = sld [smem:[#allocation0]]
  $region74: #{attn_decoder_forward.1} parent=0
    _
  %s17 = ssub.s32 1, %s15
  %s18 = scalar_select 0, %s17, %s15
  %s19 = sshll.u32 %s0, 4
  %s20 = int_to_ptr.vmem [resolvable:$true] %s19
  %22 = dma.vmem_to_smem %s20, 16, [#allocation3], [#allocation2]
  %23 = dma.done [#allocation2], 16
  %24 = sfence
  $region1: #{attn_decoder_forward.1} parent=0
    #allocation4 [shape = 'u8[8192]{0}', space=vmem, size = 0x2000, scoped, tag = 'input window, operand 1, single buffered']
    #allocation5 [shape = 's32[1]{0}', space=sflag, size = 0x4, scoped, tag = 'scoped memory for attn_decoder_forward.1']
    #allocation6 [shape = 's32[1]{0}', space=sflag, size = 0x4, scoped, tag = 'scoped memory for attn_decoder_forward.1']
    #allocation7 [shape = 'u8[4096]{0}', space=vmem, size = 0x1000, scoped, tag = 'input window, operand 11, single buffered']
    #allocation8 [shape = 's32[1]{0}', space=sflag, size = 0x4, scoped, tag = 'scoped memory for attn_decoder_forward.1']
    #allocation9 [shape = 'u8[1024]{0}', space=vmem, size = 0x400, scoped, tag = 'output window, operand 1, single buffered']
    %25 = vsyncpa [#allocation5], 0
    %26 = vsyncpa [#allocation8], 0
    %27 = vsyncpa [#allocation6], 0
    // Predicated region
    $region2: #{attn_decoder_forward.1} parent=1 // pred_check
      _
    $region3: #{attn_decoder_forward.1} parent=1 // pred_check_branch
      %29 = sbr.rel (0) target = $region5
    $region4: #{attn_decoder_forward.1} parent=1 // pred_region
      %s31 = ssub.s32 256, 256
      %32 = vsyncadd [#allocation5], %s31
      %s33 = sshll.u32 [#allocation4], 4
      %s34 = int_to_ptr.vmem [resolvable:$true] %s33
      %39 = dma.hbm_to_vmem [thread:$0]  %s1, 256, %s34, [#allocation5], 128, 128, 8
    $region5: #{attn_decoder_forward.1} parent=1 // pred_fallthru
      _
    // Predicated region
    $region6: #{attn_decoder_forward.1} parent=1 // pred_check
      _
    $region7: #{attn_decoder_forward.1} parent=1 // pred_check_branch
      %41 = sbr.rel (0) target = $region9
    $region8: #{attn_decoder_forward.1} parent=1 // pred_region
      _
    $region9: #{attn_decoder_forward.1} parent=1 // pred_fallthru
      _
    // Predicated region
    $region10: #{attn_decoder_forward.1} parent=1 // pred_check
      _
    $region11: #{attn_decoder_forward.1} parent=1 // pred_check_branch
      %43 = sbr.rel (0) target = $region13
    $region12: #{attn_decoder_forward.1} parent=1 // pred_region
      _
    $region13: #{attn_decoder_forward.1} parent=1 // pred_fallthru
      _
    // Predicated region
    $region14: #{attn_decoder_forward.1} parent=1 // pred_check
      _
    $region15: #{attn_decoder_forward.1} parent=1 // pred_check_branch
      %45 = sbr.rel (0) target = $region17
    $region16: #{attn_decoder_forward.1} parent=1 // pred_region
      _
    $region17: #{attn_decoder_forward.1} parent=1 // pred_fallthru
      _
    // Predicated region
    $region18: #{attn_decoder_forward.1} parent=1 // pred_check
      _
    $region19: #{attn_decoder_forward.1} parent=1 // pred_check_branch
      %47 = sbr.rel (0) target = $region21
    $region20: #{attn_decoder_forward.1} parent=1 // pred_region
      _
    $region21: #{attn_decoder_forward.1} parent=1 // pred_fallthru
      _
    // Predicated region
    $region22: #{attn_decoder_forward.1} parent=1 // pred_check
      _
    $region23: #{attn_decoder_forward.1} parent=1 // pred_check_branch
      %49 = sbr.rel (0) target = $region25
    $region24: #{attn_decoder_forward.1} parent=1 // pred_region
      _
    $region25: #{attn_decoder_forward.1} parent=1 // pred_fallthru
      _
    // Predicated region
    $region26: #{attn_decoder_forward.1} parent=1 // pred_check
      _
    $region27: #{attn_decoder_forward.1} parent=1 // pred_check_branch
      %51 = sbr.rel (0) target = $region29
    $region28: #{attn_decoder_forward.1} parent=1 // pred_region
      _
    $region29: #{attn_decoder_forward.1} parent=1 // pred_fallthru
      _
    // Predicated region
    $region30: #{attn_decoder_forward.1} parent=1 // pred_check
      _
    $region31: #{attn_decoder_forward.1} parent=1 // pred_check_branch
      %53 = sbr.rel (0) target = $region33
    $region32: #{attn_decoder_forward.1} parent=1 // pred_region
      _
    $region33: #{attn_decoder_forward.1} parent=1 // pred_fallthru
      _
    // Predicated region
    $region34: #{attn_decoder_forward.1} parent=1 // pred_check
      _
    $region35: #{attn_decoder_forward.1} parent=1 // pred_check_branch
      %55 = sbr.rel (0) target = $region37
    $region36: #{attn_decoder_forward.1} parent=1 // pred_region
      _
    $region37: #{attn_decoder_forward.1} parent=1 // pred_fallthru
      _
    // Predicated region
    $region38: #{attn_decoder_forward.1} parent=1 // pred_check
      _
    $region39: #{attn_decoder_forward.1} parent=1 // pred_check_branch
      %57 = sbr.rel (0) target = $region41
    $region40: #{attn_decoder_forward.1} parent=1 // pred_region
      _
    $region41: #{attn_decoder_forward.1} parent=1 // pred_fallthru
      _
    // Predicated region
    $region42: #{attn_decoder_forward.1} parent=1 // pred_check
      _
    $region43: #{attn_decoder_forward.1} parent=1 // pred_check_branch
      %59 = sbr.rel (0) target = $region45
    $region44: #{attn_decoder_forward.1} parent=1 // pred_region
      %s61 = ssub.s32 128, 128
      %62 = vsyncadd [#allocation8], %s61
      %s64 = sshll.u32 [#allocation7], 4
      %s65 = int_to_ptr.vmem [resolvable:$true] %s64
      %67 = dma.hbm_to_vmem [thread:$0]  %s11, 128, %s65, [#allocation8]
    $region45: #{attn_decoder_forward.1} parent=1 // pred_fallthru
      _
    // Predicated region
    $region46: #{attn_decoder_forward.1} parent=1 // pred_check
      _
    $region47: #{attn_decoder_forward.1} parent=1 // pred_check_branch
      %69 = sbr.rel (0) target = $region49
    $region48: #{attn_decoder_forward.1} parent=1 // pred_region
      %70 = dma.done [#allocation5], 256
    $region49: #{attn_decoder_forward.1} parent=1 // pred_fallthru
      _
    // Predicated region
    $region50: #{attn_decoder_forward.1} parent=1 // pred_check
      _
    $region51: #{attn_decoder_forward.1} parent=1 // pred_check_branch
      %72 = sbr.rel (0) target = $region53
    $region52: #{attn_decoder_forward.1} parent=1 // pred_region
      %73 = dma.done [#allocation8], 128
    $region53: #{attn_decoder_forward.1} parent=1 // pred_fallthru
      _
    %p74 = scmp.eq.s32.totalorder 0, 0
    // Predicated region
    $region54: #{attn_decoder_forward.1} parent=1 // pred_check
      %p75 = pneg %p74
    $region55: #{attn_decoder_forward.1} parent=1 // pred_check_branch
      %77 = sbr.rel (%p75) target = $region57
    $region56: #{attn_decoder_forward.1} parent=1 // pred_region
      %v78 = vld [vmem:[%s2] sm:$0x3]
      %vm79 = vcmask 254976
      %80 = vst.msk [vmem:[#allocation9] sm:$0x3] %vm79, %v78
    $region57: #{attn_decoder_forward.1} parent=1 // pred_fallthru
      _
    %v81 = vld [vmem:[#allocation9] sm:$0x3]
    %s82 = smul.u32 0, 2
    %s83 = sld [smem:[#allocation3 + %s82]]
    %s84 = scalar_lea.vmem [#allocation4], %s83
    %v85 = vld [vmem:[%s84] sm:$0x1]
    %s86 = sadd.s32 %s82, 1
    %s87 = sld [smem:[#allocation3 + %s86]]
    %s88 = scalar_lea.vmem [#allocation4], %s87
    %v89 = vld [vmem:[%s88] sm:$0x1]
    %v91 = vrot.slane %v89, 7
    %vm93 = vcmask 1040384
    %v94 = vsel %vm93, %v85, %v91
    %v95 = vld [vmem:[#allocation7] sm:$0x1]
    %v96 = vld [vmem:[#allocation7 + $0x1] sm:$0x1]
    %v97 = vld [vmem:[#allocation7 + $0x2] sm:$0x1]
    %v98 = vld [vmem:[#allocation7 + $0x3] sm:$0x1]
    %v99 = vld [vmem:[#allocation7 + $0x4] sm:$0x1]
    %v100 = vld [vmem:[%s4] sm:$0xff]
    %v101 = vld [vmem:[%s4 + $0x8] sm:$0xff]
    %v102 = vld [vmem:[%s4 + $0x10] sm:$0xff]
    %v103 = vld [vmem:[%s4 + $0x18] sm:$0xff]
    %v104 = vld [vmem:[%s5] sm:$0xff]
    %v105 = vld [vmem:[%s5 + $0x8] sm:$0xff]
    %v106 = vld [vmem:[%s5 + $0x10] sm:$0xff]
    %v107 = vld [vmem:[%s5 + $0x18] sm:$0xff]
    %vm108 = vcmask 261120
    %v110 = vsel %vm108, %v81, 0
    %112 = vmatprep.subr.mxu0 0.0
    %113 = vmatpush1.msra.mxu0 0.0
    %114 = vmatprep.subr.mxu0 0.0
    %115 = vmatpush1.msra.mxu0 0.0
    %116 = vmatprep.subr.mxu0 0.0
    %117 = vmatpush1.msra.mxu0 0.0
    %118 = vmatprep.subr.mxu0 0.0
    %119 = vmatpush1.msra.mxu0 0.0
    %120 = vmatprep.subr.mxu0 0.0
    %121 = vmatpush1.msra.mxu0 0.0
    %122 = vmatprep.subr.mxu0 0.0
    %123 = vmatpush1.msra.mxu0 0.0
    %124 = vmatprep.subr.mxu0 0.0
    %125 = vmatpush1.msra.mxu0 0.0
    %126 = vmatprep.subr.mxu0 0.0
    %127 = vmatpush1.msra.mxu0 0.0
    %128 = vmatprep.subr.mxu0 0.0
    %129 = vmatpush1.msra.mxu0 0.0
    %130 = vmatprep.subr.mxu0 0.0
    %131 = vmatpush1.msra.mxu0 0.0
    %132 = vmatprep.subr.mxu0 0.0
    %133 = vmatpush1.msra.mxu0 0.0
    %134 = vmatprep.subr.mxu0 0.0
    %135 = vmatpush1.msra.mxu0 0.0
    %136 = vmatprep.subr.mxu0 0.0
    %137 = vmatpush1.msra.mxu0 %v107
    %138 = vmatprep.subr.mxu0 0.0
    %139 = vmatpush1.msra.mxu0 %v106
    %140 = vmatprep.subr.mxu0 0.0
    %141 = vmatpush1.msra.mxu0 %v105
    %142 = vmatprep.subr.mxu0 0.0
    %143 = vmatpush1.msra.mxu0 %v104
    %144 = vmatprep.subr.mxu0 0.0
    %145 = vmatpush2.msra.mxu0 0.0
    %146 = vmatprep.subr.mxu0 0.0
    %147 = vmatpush2.msra.mxu0 0.0
    %148 = vmatprep.subr.mxu0 0.0
    %149 = vmatpush2.msra.mxu0 0.0
    %150 = vmatprep.subr.mxu0 0.0
    %151 = vmatpush2.msra.mxu0 0.0
    %152 = vmatprep.subr.mxu0 0.0
    %153 = vmatpush2.msra.mxu0 0.0
    %154 = vmatprep.subr.mxu0 0.0
    %155 = vmatpush2.msra.mxu0 0.0
    %156 = vmatprep.subr.mxu0 0.0
    %157 = vmatpush2.msra.mxu0 0.0
    %158 = vmatprep.subr.mxu0 0.0
    %159 = vmatpush2.msra.mxu0 0.0
    %160 = vmatprep.subr.mxu0 0.0
    %161 = vmatpush2.msra.mxu0 0.0
    %162 = vmatprep.subr.mxu0 0.0
    %163 = vmatpush2.msra.mxu0 0.0
    %164 = vmatprep.subr.mxu0 0.0
    %165 = vmatpush2.msra.mxu0 0.0
    %166 = vmatprep.subr.mxu0 0.0
    %167 = vmatpush2.msra.mxu0 0.0
    %168 = vmatprep.subr.mxu0 0.0
    %169 = vmatpush2.msra.mxu0 0.0
    %170 = vmatprep.subr.mxu0 0.0
    %171 = vmatpush2.msra.mxu0 0.0
    %172 = vmatprep.subr.mxu0 0.0
    %173 = vmatpush2.msra.mxu0 0.0
    %174 = vmatprep.subr.mxu0 0.0
    %175 = vmatpush2.msra.mxu0 0.0
    %176 = vmatprep.mubr.f32.mxu0 0.0
    %177 = vmatmul.mubr.f32.gmra.mxu0 %v110
    %v178 = vpop.f32.mrf.mxu0
    %v179 = vadd.f32 0.0, %v178
    %v180 = vpop.f32.mrf.mxu0
    %181 = vdwg.mxu0
    %v183 = vsel %vm108, %v94, 0
    %185 = vmatprep.subr.mxu0 0.0
    %186 = vmatpush1.msra.mxu0 0.0
    %187 = vmatprep.subr.mxu0 0.0
    %188 = vmatpush1.msra.mxu0 0.0
    %189 = vmatprep.subr.mxu0 0.0
    %190 = vmatpush1.msra.mxu0 0.0
    %191 = vmatprep.subr.mxu0 0.0
    %192 = vmatpush1.msra.mxu0 0.0
    %193 = vmatprep.subr.mxu0 0.0
    %194 = vmatpush1.msra.mxu0 0.0
    %195 = vmatprep.subr.mxu0 0.0
    %196 = vmatpush1.msra.mxu0 0.0
    %197 = vmatprep.subr.mxu0 0.0
    %198 = vmatpush1.msra.mxu0 0.0
    %199 = vmatprep.subr.mxu0 0.0
    %200 = vmatpush1.msra.mxu0 0.0
    %201 = vmatprep.subr.mxu0 0.0
    %202 = vmatpush1.msra.mxu0 0.0
    %203 = vmatprep.subr.mxu0 0.0
    %204 = vmatpush1.msra.mxu0 0.0
    %205 = vmatprep.subr.mxu0 0.0
    %206 = vmatpush1.msra.mxu0 0.0
    %207 = vmatprep.subr.mxu0 0.0
    %208 = vmatpush1.msra.mxu0 0.0
    %209 = vmatprep.subr.mxu0 0.0
    %210 = vmatpush1.msra.mxu0 %v103
    %211 = vmatprep.subr.mxu0 0.0
    %212 = vmatpush1.msra.mxu0 %v102
    %213 = vmatprep.subr.mxu0 0.0
    %214 = vmatpush1.msra.mxu0 %v101
    %215 = vmatprep.subr.mxu0 0.0
    %216 = vmatpush1.msra.mxu0 %v100
    %217 = vmatprep.subr.mxu0 0.0
    %218 = vmatpush2.msra.mxu0 0.0
    %219 = vmatprep.subr.mxu0 0.0
    %220 = vmatpush2.msra.mxu0 0.0
    %221 = vmatprep.subr.mxu0 0.0
    %222 = vmatpush2.msra.mxu0 0.0
    %223 = vmatprep.subr.mxu0 0.0
    %224 = vmatpush2.msra.mxu0 0.0
    %225 = vmatprep.subr.mxu0 0.0
    %226 = vmatpush2.msra.mxu0 0.0
    %227 = vmatprep.subr.mxu0 0.0
    %228 = vmatpush2.msra.mxu0 0.0
    %229 = vmatprep.subr.mxu0 0.0
    %230 = vmatpush2.msra.mxu0 0.0
    %231 = vmatprep.subr.mxu0 0.0
    %232 = vmatpush2.msra.mxu0 0.0
    %233 = vmatprep.subr.mxu0 0.0
    %234 = vmatpush2.msra.mxu0 0.0
    %235 = vmatprep.subr.mxu0 0.0
    %236 = vmatpush2.msra.mxu0 0.0
    %237 = vmatprep.subr.mxu0 0.0
    %238 = vmatpush2.msra.mxu0 0.0
    %239 = vmatprep.subr.mxu0 0.0
    %240 = vmatpush2.msra.mxu0 0.0
    %241 = vmatprep.subr.mxu0 0.0
    %242 = vmatpush2.msra.mxu0 0.0
    %243 = vmatprep.subr.mxu0 0.0
    %244 = vmatpush2.msra.mxu0 0.0
    %245 = vmatprep.subr.mxu0 0.0
    %246 = vmatpush2.msra.mxu0 0.0
    %247 = vmatprep.subr.mxu0 0.0
    %248 = vmatpush2.msra.mxu0 0.0
    %249 = vmatprep.mubr.f32.mxu0 0.0
    %250 = vmatmul.mubr.f32.gmra.mxu0 %v183
    %v251 = vpop.f32.mrf.mxu0
    %v252 = vadd.f32 %v179, %v251
    %v253 = vpop.f32.mrf.mxu0
    %254 = vdwg.mxu0
    %v255 = vlaneseq
    %v256 = vshrl.u32 %v255, 7
    %v257 = vsub.s32 0, %v256
    %v258 = vrot.slane %v95, %v257
    %v259 = vadd.f32 %v252, %v258
    %vm260 = vcmask 58368
    %v261 = vsel %vm260, %v259, -inf
    %262 = vmax.xlane.f32.xlu0 %v261
    %v263 = vpop.xlane.xlu0 %262
    %v264 = vsub.f32 %v259, %v263
    %v265 = vmul.f32 %v264, 1.442695
    %v266 = vpow.pop %v265
    %v267 = vsel %vm260, %v266, 0.0
    %268 = vadd.xlane.f32.xlu0 %v267
    %v269 = vpop.xlane.xlu0 %268
    %v270 = vrcp.pop %v269
    %v271 = vmul.f32 %v266, %v270
    %v272 = vld [vmem:[%s3] sm:$0x3]
    %274 = vset.pattern.permute.xlu0 0
    %275 = vperm.xlu0 %274, %v271
    %v276 = vpop.permute.xlu0 %275
    %v278 = vmul.f32 %v276, %v272
    %v279 = vadd.f32 %v278, 0.0
    %s280 = scalar_lea.vmem %s3, 2
    %v281 = vld [vmem:[%s280] sm:$0x3]
    %282 = vset.pattern.permute.xlu0 1
    %283 = vperm.xlu0 %282, %v271
    %v284 = vpop.permute.xlu0 %283
    %v286 = vmul.f32 %v284, %v281
    %v287 = vadd.f32 %v279, %v286
    %s288 = scalar_lea.vmem %s3, 4
    %v289 = vld [vmem:[%s288] sm:$0x3]
    %290 = vset.pattern.permute.xlu0 2
    %291 = vperm.xlu0 %290, %v271
    %v292 = vpop.permute.xlu0 %291
    %v294 = vmul.f32 %v292, %v289
    %v295 = vadd.f32 %v287, %v294
    %s296 = scalar_lea.vmem %s3, 6
    %v297 = vld [vmem:[%s296] sm:$0x3]
    %298 = vset.pattern.permute.xlu0 3
    %299 = vperm.xlu0 %298, %v271
    %v300 = vpop.permute.xlu0 %299
    %v302 = vmul.f32 %v300, %v297
    %v303 = vadd.f32 %v295, %v302
    %s304 = scalar_lea.vmem %s3, 8
    %v305 = vld [vmem:[%s304] sm:$0x3]
    %306 = vset.pattern.permute.xlu0 4
    %307 = vperm.xlu0 %306, %v271
    %v308 = vpop.permute.xlu0 %307
    %v310 = vmul.f32 %v308, %v305
    %v311 = vadd.f32 %v303, %v310
    %s312 = scalar_lea.vmem %s3, 10
    %v313 = vld [vmem:[%s312] sm:$0x3]
    %314 = vset.pattern.permute.xlu0 5
    %315 = vperm.xlu0 %314, %v271
    %v316 = vpop.permute.xlu0 %315
    %v318 = vmul.f32 %v316, %v313
    %v319 = vadd.f32 %v311, %v318
    %s320 = scalar_lea.vmem %s3, 12
    %v321 = vld [vmem:[%s320] sm:$0x3]
    %322 = vset.pattern.permute.xlu0 6
    %323 = vperm.xlu0 %322, %v271
    %v324 = vpop.permute.xlu0 %323
    %v326 = vmul.f32 %v324, %v321
    %v327 = vadd.f32 %v319, %v326
    %s328 = scalar_lea.vmem %s3, 14
    %v329 = vld [vmem:[%s328] sm:$0x3]
    %330 = vset.pattern.permute.xlu0 7
    %331 = vperm.xlu0 %330, %v271
    %v332 = vpop.permute.xlu0 %331
    %v334 = vmul.f32 %v332, %v329
    %v335 = vadd.f32 %v327, %v334
    %v336 = vld [vmem:[%s6] sm:$0xff]
    %v337 = vld [vmem:[%s6 + $0x8] sm:$0xff]
    %v338 = vld [vmem:[%s6 + $0x10] sm:$0xff]
    %v339 = vld [vmem:[%s6 + $0x18] sm:$0xff]
    %v340 = vld [vmem:[%s7] sm:$0xff]
    %v341 = vld [vmem:[%s7 + $0x8] sm:$0xff]
    %v342 = vld [vmem:[%s7 + $0x10] sm:$0xff]
    %v343 = vld [vmem:[%s7 + $0x18] sm:$0xff]
    %v345 = vsel %vm108, %v335, 0
    %347 = vmatprep.subr.mxu0 0.0
    %348 = vmatpush1.msra.mxu0 0.0
    %349 = vmatprep.subr.mxu0 0.0
    %350 = vmatpush1.msra.mxu0 0.0
    %351 = vmatprep.subr.mxu0 0.0
    %352 = vmatpush1.msra.mxu0 0.0
    %353 = vmatprep.subr.mxu0 0.0
    %354 = vmatpush1.msra.mxu0 0.0
    %355 = vmatprep.subr.mxu0 0.0
    %356 = vmatpush1.msra.mxu0 0.0
    %357 = vmatprep.subr.mxu0 0.0
    %358 = vmatpush1.msra.mxu0 0.0
    %359 = vmatprep.subr.mxu0 0.0
    %360 = vmatpush1.msra.mxu0 0.0
    %361 = vmatprep.subr.mxu0 0.0
    %362 = vmatpush1.msra.mxu0 0.0
    %363 = vmatprep.subr.mxu0 0.0
    %364 = vmatpush1.msra.mxu0 0.0
    %365 = vmatprep.subr.mxu0 0.0
    %366 = vmatpush1.msra.mxu0 0.0
    %367 = vmatprep.subr.mxu0 0.0
    %368 = vmatpush1.msra.mxu0 0.0
    %369 = vmatprep.subr.mxu0 0.0
    %370 = vmatpush1.msra.mxu0 0.0
    %371 = vmatprep.subr.mxu0 0.0
    %372 = vmatpush1.msra.mxu0 %v343
    %373 = vmatprep.subr.mxu0 0.0
    %374 = vmatpush1.msra.mxu0 %v342
    %375 = vmatprep.subr.mxu0 0.0
    %376 = vmatpush1.msra.mxu0 %v341
    %377 = vmatprep.subr.mxu0 0.0
    %378 = vmatpush1.msra.mxu0 %v340
    %379 = vmatprep.subr.mxu0 0.0
    %380 = vmatpush2.msra.mxu0 0.0
    %381 = vmatprep.subr.mxu0 0.0
    %382 = vmatpush2.msra.mxu0 0.0
    %383 = vmatprep.subr.mxu0 0.0
    %384 = vmatpush2.msra.mxu0 0.0
    %385 = vmatprep.subr.mxu0 0.0
    %386 = vmatpush2.msra.mxu0 0.0
    %387 = vmatprep.subr.mxu0 0.0
    %388 = vmatpush2.msra.mxu0 0.0
    %389 = vmatprep.subr.mxu0 0.0
    %390 = vmatpush2.msra.mxu0 0.0
    %391 = vmatprep.subr.mxu0 0.0
    %392 = vmatpush2.msra.mxu0 0.0
    %393 = vmatprep.subr.mxu0 0.0
    %394 = vmatpush2.msra.mxu0 0.0
    %395 = vmatprep.subr.mxu0 0.0
    %396 = vmatpush2.msra.mxu0 0.0
    %397 = vmatprep.subr.mxu0 0.0
    %398 = vmatpush2.msra.mxu0 0.0
    %399 = vmatprep.subr.mxu0 0.0
    %400 = vmatpush2.msra.mxu0 0.0
    %401 = vmatprep.subr.mxu0 0.0
    %402 = vmatpush2.msra.mxu0 0.0
    %403 = vmatprep.subr.mxu0 0.0
    %404 = vmatpush2.msra.mxu0 0.0
    %405 = vmatprep.subr.mxu0 0.0
    %406 = vmatpush2.msra.mxu0 0.0
    %407 = vmatprep.subr.mxu0 0.0
    %408 = vmatpush2.msra.mxu0 0.0
    %409 = vmatprep.subr.mxu0 0.0
    %410 = vmatpush2.msra.mxu0 0.0
    %411 = vmatprep.mubr.f32.mxu0 0.0
    %412 = vmatmul.mubr.f32.gmra.mxu0 %v345
    %v413 = vpop.f32.mrf.mxu0
    %v414 = vadd.f32 0.0, %v413
    %v415 = vpop.f32.mrf.mxu0
    %416 = vdwg.mxu0
    %417 = vmatprep.subr.mxu0 0.0
    %418 = vmatpush1.msra.mxu0 0.0
    %419 = vmatprep.subr.mxu0 0.0
    %420 = vmatpush1.msra.mxu0 0.0
    %421 = vmatprep.subr.mxu0 0.0
    %422 = vmatpush1.msra.mxu0 0.0
    %423 = vmatprep.subr.mxu0 0.0
    %424 = vmatpush1.msra.mxu0 0.0
    %425 = vmatprep.subr.mxu0 0.0
    %426 = vmatpush1.msra.mxu0 0.0
    %427 = vmatprep.subr.mxu0 0.0
    %428 = vmatpush1.msra.mxu0 0.0
    %429 = vmatprep.subr.mxu0 0.0
    %430 = vmatpush1.msra.mxu0 0.0
    %431 = vmatprep.subr.mxu0 0.0
    %432 = vmatpush1.msra.mxu0 0.0
    %433 = vmatprep.subr.mxu0 0.0
    %434 = vmatpush1.msra.mxu0 0.0
    %435 = vmatprep.subr.mxu0 0.0
    %436 = vmatpush1.msra.mxu0 0.0
    %437 = vmatprep.subr.mxu0 0.0
    %438 = vmatpush1.msra.mxu0 0.0
    %439 = vmatprep.subr.mxu0 0.0
    %440 = vmatpush1.msra.mxu0 0.0
    %441 = vmatprep.subr.mxu0 0.0
    %442 = vmatpush1.msra.mxu0 %v339
    %443 = vmatprep.subr.mxu0 0.0
    %444 = vmatpush1.msra.mxu0 %v338
    %445 = vmatprep.subr.mxu0 0.0
    %446 = vmatpush1.msra.mxu0 %v337
    %447 = vmatprep.subr.mxu0 0.0
    %448 = vmatpush1.msra.mxu0 %v336
    %449 = vmatprep.subr.mxu0 0.0
    %450 = vmatpush2.msra.mxu0 0.0
    %451 = vmatprep.subr.mxu0 0.0
    %452 = vmatpush2.msra.mxu0 0.0
    %453 = vmatprep.subr.mxu0 0.0
    %454 = vmatpush2.msra.mxu0 0.0
    %455 = vmatprep.subr.mxu0 0.0
    %456 = vmatpush2.msra.mxu0 0.0
    %457 = vmatprep.subr.mxu0 0.0
    %458 = vmatpush2.msra.mxu0 0.0
    %459 = vmatprep.subr.mxu0 0.0
    %460 = vmatpush2.msra.mxu0 0.0
    %461 = vmatprep.subr.mxu0 0.0
    %462 = vmatpush2.msra.mxu0 0.0
    %463 = vmatprep.subr.mxu0 0.0
    %464 = vmatpush2.msra.mxu0 0.0
    %465 = vmatprep.subr.mxu0 0.0
    %466 = vmatpush2.msra.mxu0 0.0
    %467 = vmatprep.subr.mxu0 0.0
    %468 = vmatpush2.msra.mxu0 0.0
    %469 = vmatprep.subr.mxu0 0.0
    %470 = vmatpush2.msra.mxu0 0.0
    %471 = vmatprep.subr.mxu0 0.0
    %472 = vmatpush2.msra.mxu0 0.0
    %473 = vmatprep.subr.mxu0 0.0
    %474 = vmatpush2.msra.mxu0 0.0
    %475 = vmatprep.subr.mxu0 0.0
    %476 = vmatpush2.msra.mxu0 0.0
    %477 = vmatprep.subr.mxu0 0.0
    %478 = vmatpush2.msra.mxu0 0.0
    %479 = vmatprep.subr.mxu0 0.0
    %480 = vmatpush2.msra.mxu0 0.0
    %481 = vmatprep.mubr.f32.mxu0 0.0
    %482 = vmatmul.mubr.f32.gmra.mxu0 %v183
    %v483 = vpop.f32.mrf.mxu0
    %v484 = vadd.f32 %v414, %v483
    %v485 = vpop.f32.mrf.mxu0
    %486 = vdwg.mxu0
    %v487 = vlaneseq
    %v488 = vshrl.u32 %v487, 7
    %v489 = vsub.s32 0, %v488
    %v490 = vrot.slane %v96, %v489
    %v491 = vadd.f32 %v484, %v490
    %v492 = vmax.f32 %v491, 0.0
    %v493 = vld [vmem:[%s8] sm:$0xff]
    %v494 = vld [vmem:[%s8 + $0x8] sm:$0xff]
    %v495 = vld [vmem:[%s8 + $0x10] sm:$0xff]
    %v496 = vld [vmem:[%s8 + $0x18] sm:$0xff]
    %v497 = vlaneseq
    %v498 = vshrl.u32 %v497, 7
    %v499 = vsub.s32 0, %v498
    %v500 = vrot.slane %v97, %v499
    %v502 = vsel %vm108, %v492, 0
    %504 = vmatprep.subr.mxu0 0.0
    %505 = vmatpush1.msra.mxu0 0.0
    %506 = vmatprep.subr.mxu0 0.0
    %507 = vmatpush1.msra.mxu0 0.0
    %508 = vmatprep.subr.mxu0 0.0
    %509 = vmatpush1.msra.mxu0 0.0
    %510 = vmatprep.subr.mxu0 0.0
    %511 = vmatpush1.msra.mxu0 0.0
    %512 = vmatprep.subr.mxu0 0.0
    %513 = vmatpush1.msra.mxu0 0.0
    %514 = vmatprep.subr.mxu0 0.0
    %515 = vmatpush1.msra.mxu0 0.0
    %516 = vmatprep.subr.mxu0 0.0
    %517 = vmatpush1.msra.mxu0 0.0
    %518 = vmatprep.subr.mxu0 0.0
    %519 = vmatpush1.msra.mxu0 0.0
    %520 = vmatprep.subr.mxu0 0.0
    %521 = vmatpush1.msra.mxu0 0.0
    %522 = vmatprep.subr.mxu0 0.0
    %523 = vmatpush1.msra.mxu0 0.0
    %524 = vmatprep.subr.mxu0 0.0
    %525 = vmatpush1.msra.mxu0 0.0
    %526 = vmatprep.subr.mxu0 0.0
    %527 = vmatpush1.msra.mxu0 0.0
    %528 = vmatprep.subr.mxu0 0.0
    %529 = vmatpush1.msra.mxu0 %v496
    %530 = vmatprep.subr.mxu0 0.0
    %531 = vmatpush1.msra.mxu0 %v495
    %532 = vmatprep.subr.mxu0 0.0
    %533 = vmatpush1.msra.mxu0 %v494
    %534 = vmatprep.subr.mxu0 0.0
    %535 = vmatpush1.msra.mxu0 %v493
    %536 = vmatprep.subr.mxu0 0.0
    %537 = vmatpush2.msra.mxu0 0.0
    %538 = vmatprep.subr.mxu0 0.0
    %539 = vmatpush2.msra.mxu0 0.0
    %540 = vmatprep.subr.mxu0 0.0
    %541 = vmatpush2.msra.mxu0 0.0
    %542 = vmatprep.subr.mxu0 0.0
    %543 = vmatpush2.msra.mxu0 0.0
    %544 = vmatprep.subr.mxu0 0.0
    %545 = vmatpush2.msra.mxu0 0.0
    %546 = vmatprep.subr.mxu0 0.0
    %547 = vmatpush2.msra.mxu0 0.0
    %548 = vmatprep.subr.mxu0 0.0
    %549 = vmatpush2.msra.mxu0 0.0
    %550 = vmatprep.subr.mxu0 0.0
    %551 = vmatpush2.msra.mxu0 0.0
    %552 = vmatprep.subr.mxu0 0.0
    %553 = vmatpush2.msra.mxu0 0.0
    %554 = vmatprep.subr.mxu0 0.0
    %555 = vmatpush2.msra.mxu0 0.0
    %556 = vmatprep.subr.mxu0 0.0
    %557 = vmatpush2.msra.mxu0 0.0
    %558 = vmatprep.subr.mxu0 0.0
    %559 = vmatpush2.msra.mxu0 0.0
    %560 = vmatprep.subr.mxu0 0.0
    %561 = vmatpush2.msra.mxu0 0.0
    %562 = vmatprep.subr.mxu0 0.0
    %563 = vmatpush2.msra.mxu0 0.0
    %564 = vmatprep.subr.mxu0 0.0
    %565 = vmatpush2.msra.mxu0 0.0
    %566 = vmatprep.subr.mxu0 0.0
    %567 = vmatpush2.msra.mxu0 0.0
    %568 = vmatprep.mubr.f32.mxu0 0.0
    %569 = vmatmul.mubr.f32.gmra.mxu0 %v502
    %v570 = vpop.f32.mrf.mxu0
    %v571 = vadd.f32 %v500, %v570
    %v572 = vpop.f32.mrf.mxu0
    %573 = vdwg.mxu0
    %v574 = vld [vmem:[%s9] sm:$0xff]
    %v575 = vld [vmem:[%s9 + $0x8] sm:$0xff]
    %v576 = vld [vmem:[%s9 + $0x10] sm:$0xff]
    %v577 = vld [vmem:[%s9 + $0x18] sm:$0xff]
    %v578 = vlaneseq
    %v579 = vshrl.u32 %v578, 7
    %v580 = vsub.s32 0, %v579
    %v581 = vrot.slane %v98, %v580
    %582 = vmatprep.subr.mxu0 0.0
    %583 = vmatpush1.msra.mxu0 0.0
    %584 = vmatprep.subr.mxu0 0.0
    %585 = vmatpush1.msra.mxu0 0.0
    %586 = vmatprep.subr.mxu0 0.0
    %587 = vmatpush1.msra.mxu0 0.0
    %588 = vmatprep.subr.mxu0 0.0
    %589 = vmatpush1.msra.mxu0 0.0
    %590 = vmatprep.subr.mxu0 0.0
    %591 = vmatpush1.msra.mxu0 0.0
    %592 = vmatprep.subr.mxu0 0.0
    %593 = vmatpush1.msra.mxu0 0.0
    %594 = vmatprep.subr.mxu0 0.0
    %595 = vmatpush1.msra.mxu0 0.0
    %596 = vmatprep.subr.mxu0 0.0
    %597 = vmatpush1.msra.mxu0 0.0
    %598 = vmatprep.subr.mxu0 0.0
    %599 = vmatpush1.msra.mxu0 0.0
    %600 = vmatprep.subr.mxu0 0.0
    %601 = vmatpush1.msra.mxu0 0.0
    %602 = vmatprep.subr.mxu0 0.0
    %603 = vmatpush1.msra.mxu0 0.0
    %604 = vmatprep.subr.mxu0 0.0
    %605 = vmatpush1.msra.mxu0 0.0
    %606 = vmatprep.subr.mxu0 0.0
    %607 = vmatpush1.msra.mxu0 %v577
    %608 = vmatprep.subr.mxu0 0.0
    %609 = vmatpush1.msra.mxu0 %v576
    %610 = vmatprep.subr.mxu0 0.0
    %611 = vmatpush1.msra.mxu0 %v575
    %612 = vmatprep.subr.mxu0 0.0
    %613 = vmatpush1.msra.mxu0 %v574
    %614 = vmatprep.subr.mxu0 0.0
    %615 = vmatpush2.msra.mxu0 0.0
    %616 = vmatprep.subr.mxu0 0.0
    %617 = vmatpush2.msra.mxu0 0.0
    %618 = vmatprep.subr.mxu0 0.0
    %619 = vmatpush2.msra.mxu0 0.0
    %620 = vmatprep.subr.mxu0 0.0
    %621 = vmatpush2.msra.mxu0 0.0
    %622 = vmatprep.subr.mxu0 0.0
    %623 = vmatpush2.msra.mxu0 0.0
    %624 = vmatprep.subr.mxu0 0.0
    %625 = vmatpush2.msra.mxu0 0.0
    %626 = vmatprep.subr.mxu0 0.0
    %627 = vmatpush2.msra.mxu0 0.0
    %628 = vmatprep.subr.mxu0 0.0
    %629 = vmatpush2.msra.mxu0 0.0
    %630 = vmatprep.subr.mxu0 0.0
    %631 = vmatpush2.msra.mxu0 0.0
    %632 = vmatprep.subr.mxu0 0.0
    %633 = vmatpush2.msra.mxu0 0.0
    %634 = vmatprep.subr.mxu0 0.0
    %635 = vmatpush2.msra.mxu0 0.0
    %636 = vmatprep.subr.mxu0 0.0
    %637 = vmatpush2.msra.mxu0 0.0
    %638 = vmatprep.subr.mxu0 0.0
    %639 = vmatpush2.msra.mxu0 0.0
    %640 = vmatprep.subr.mxu0 0.0
    %641 = vmatpush2.msra.mxu0 0.0
    %642 = vmatprep.subr.mxu0 0.0
    %643 = vmatpush2.msra.mxu0 0.0
    %644 = vmatprep.subr.mxu0 0.0
    %645 = vmatpush2.msra.mxu0 0.0
    %646 = vmatprep.mubr.f32.mxu0 0.0
    %647 = vmatmul.mubr.f32.gmra.mxu0 %v110
    %v648 = vpop.f32.mrf.mxu0
    %v649 = vadd.f32 %v581, %v648
    %v650 = vpop.f32.mrf.mxu0
    %651 = vdwg.mxu0
    %v652 = vadd.f32 %v571, %v649
    %v653 = vxor.u32 %v652, 2147483648
    %v654 = vmul.f32 %v653, 1.442695
    %v655 = vpow.pop %v654
    %v656 = vadd.f32 %v655, 1.0
    %v657 = vrcp.pop %v656
    %v658 = vmul.f32 1.0, %v657
    %660 = vrot.lane.b32.xlu0 %v649, 64
    %v661 = vpop.permute.xlu0 %660
    %v663 = vmul.f32 %v658, %v661
    %665 = vrot.lane.b32.xlu0 %v663, 64
    %v666 = vpop.permute.xlu0 %665
    %v668 = vadd.f32 %v571, %v666
    %v669 = vtanh.pop %v668
    %v670 = vsub.f32 1.0, %v658
    %672 = vrot.lane.b32.xlu0 %v669, 96
    %v673 = vpop.permute.xlu0 %672
    %v675 = vmul.f32 %v670, %v673
    %676 = vrot.lane.b32.xlu0 %v81, 32
    %v677 = vpop.permute.xlu0 %676
    %v679 = vmul.f32 %v658, %v677
    %v680 = vadd.f32 %v675, %v679
    %v681 = vld [vmem:[%s10] sm:$0xff]
    %v682 = vld [vmem:[%s10 + $0x8] sm:$0xff]
    %v683 = vld [vmem:[%s10 + $0x10] sm:$0xff]
    %v684 = vld [vmem:[%s10 + $0x18] sm:$0xff]
    %v685 = vlaneseq
    %v686 = vshrl.u32 %v685, 7
    %v687 = vsub.s32 0, %v686
    %v688 = vrot.slane %v99, %v687
    %690 = vrot.lane.b32.xlu0 %v680, 96
    %v691 = vpop.permute.xlu0 %690
    %v692 = vsel %vm108, %v691, 0
    %694 = vmatprep.subr.mxu0 0.0
    %695 = vmatpush1.msra.mxu0 0.0
    %696 = vmatprep.subr.mxu0 0.0
    %697 = vmatpush1.msra.mxu0 0.0
    %698 = vmatprep.subr.mxu0 0.0
    %699 = vmatpush1.msra.mxu0 0.0
    %700 = vmatprep.subr.mxu0 0.0
    %701 = vmatpush1.msra.mxu0 0.0
    %702 = vmatprep.subr.mxu0 0.0
    %703 = vmatpush1.msra.mxu0 0.0
    %704 = vmatprep.subr.mxu0 0.0
    %705 = vmatpush1.msra.mxu0 0.0
    %706 = vmatprep.subr.mxu0 0.0
    %707 = vmatpush1.msra.mxu0 0.0
    %708 = vmatprep.subr.mxu0 0.0
    %709 = vmatpush1.msra.mxu0 0.0
    %710 = vmatprep.subr.mxu0 0.0
    %711 = vmatpush1.msra.mxu0 0.0
    %712 = vmatprep.subr.mxu0 0.0
    %713 = vmatpush1.msra.mxu0 0.0
    %714 = vmatprep.subr.mxu0 0.0
    %715 = vmatpush1.msra.mxu0 0.0
    %716 = vmatprep.subr.mxu0 0.0
    %717 = vmatpush1.msra.mxu0 0.0
    %718 = vmatprep.subr.mxu0 0.0
    %719 = vmatpush1.msra.mxu0 %v684
    %720 = vmatprep.subr.mxu0 0.0
    %721 = vmatpush1.msra.mxu0 %v683
    %722 = vmatprep.subr.mxu0 0.0
    %723 = vmatpush1.msra.mxu0 %v682
    %724 = vmatprep.subr.mxu0 0.0
    %725 = vmatpush1.msra.mxu0 %v681
    %726 = vmatprep.subr.mxu0 0.0
    %727 = vmatpush2.msra.mxu0 0.0
    %728 = vmatprep.subr.mxu0 0.0
    %729 = vmatpush2.msra.mxu0 0.0
    %730 = vmatprep.subr.mxu0 0.0
    %731 = vmatpush2.msra.mxu0 0.0
    %732 = vmatprep.subr.mxu0 0.0
    %733 = vmatpush2.msra.mxu0 0.0
    %734 = vmatprep.subr.mxu0 0.0
    %735 = vmatpush2.msra.mxu0 0.0
    %736 = vmatprep.subr.mxu0 0.0
    %737 = vmatpush2.msra.mxu0 0.0
    %738 = vmatprep.subr.mxu0 0.0
    %739 = vmatpush2.msra.mxu0 0.0
    %740 = vmatprep.subr.mxu0 0.0
    %741 = vmatpush2.msra.mxu0 0.0
    %742 = vmatprep.subr.mxu0 0.0
    %743 = vmatpush2.msra.mxu0 0.0
    %744 = vmatprep.subr.mxu0 0.0
    %745 = vmatpush2.msra.mxu0 0.0
    %746 = vmatprep.subr.mxu0 0.0
    %747 = vmatpush2.msra.mxu0 0.0
    %748 = vmatprep.subr.mxu0 0.0
    %749 = vmatpush2.msra.mxu0 0.0
    %750 = vmatprep.subr.mxu0 0.0
    %751 = vmatpush2.msra.mxu0 0.0
    %752 = vmatprep.subr.mxu0 0.0
    %753 = vmatpush2.msra.mxu0 0.0
    %754 = vmatprep.subr.mxu0 0.0
    %755 = vmatpush2.msra.mxu0 0.0
    %756 = vmatprep.subr.mxu0 0.0
    %757 = vmatpush2.msra.mxu0 0.0
    %758 = vmatprep.mubr.f32.mxu0 0.0
    %759 = vmatmul.mubr.f32.gmra.mxu0 %v692
    %v760 = vpop.f32.mrf.mxu0
    %v761 = vadd.f32 %v688, %v760
    %v762 = vpop.f32.mrf.mxu0
    %763 = vdwg.mxu0
    %vm764 = vcmask 123904
    %v765 = vsel %vm764, %v761, -inf
    %766 = vmax.xlane.f32.xlu0 %v765
    %v767 = vpop.xlane.xlu0 %766
    %v768 = vsub.f32 %v761, %v767
    %v769 = vmul.f32 %v768, 1.442695
    %v770 = vpow.pop %v769
    %v771 = vsel %vm764, %v770, 0.0
    %772 = vadd.xlane.f32.xlu0 %v771
    %v773 = vpop.xlane.xlu0 %772
    %v774 = vlog2.pop %v773
    %v775 = vmul.f32 %v774, 0.6931472
    %v776 = vsub.f32 %v768, %v775
    %777 = vrot.lane.b32.xlu0 %v271, 16
    %v778 = vpop.permute.xlu0 %777
    %vm780 = vcmask 130048
    %v781 = vsel %vm780, %v776, %v778
    %vm782 = vcmask 195584
    %v783 = vsel %vm782, %v781, 0.0
    %784 = vst [vmem:[%s12] sm:$0x3] %v783
    %vm786 = vcmask 254976
    %787 = vst.msk [vmem:[#allocation9] sm:$0x3] %vm786, %v691
    // Predicated region
    $region58: #{attn_decoder_forward.1} parent=1 // pred_check
      _
    $region59: #{attn_decoder_forward.1} parent=1 // pred_check_branch
      %789 = sbr.rel (0) target = $region61
    $region60: #{attn_decoder_forward.1} parent=1 // pred_region
      _
    $region61: #{attn_decoder_forward.1} parent=1 // pred_fallthru
      _
    // Predicated region
    $region62: #{attn_decoder_forward.1} parent=1 // pred_check
      _
    $region63: #{attn_decoder_forward.1} parent=1 // pred_check_branch
      %791 = sbr.rel (0) target = $region65
    $region64: #{attn_decoder_forward.1} parent=1 // pred_region
      %s793 = ssub.s32 32, 32
      %794 = vsyncadd [#allocation6], %s793
      %s796 = sshll.u32 [#allocation9], 4
      %s797 = int_to_ptr.vmem [resolvable:$true] %s796
      %799 = dma.vmem_to_hbm [thread:$0]  %s797, 32, %s13, [#allocation6]
    $region65: #{attn_decoder_forward.1} parent=1 // pred_fallthru
      _
    // Predicated region
    $region66: #{attn_decoder_forward.1} parent=1 // pred_check
      _
    $region67: #{attn_decoder_forward.1} parent=1 // pred_check_branch
      %801 = sbr.rel (0) target = $region69
    $region68: #{attn_decoder_forward.1} parent=1 // pred_region
      _
    $region69: #{attn_decoder_forward.1} parent=1 // pred_fallthru
      _
    // Predicated region
    $region70: #{attn_decoder_forward.1} parent=1 // pred_check
      _
    $region71: #{attn_decoder_forward.1} parent=1 // pred_check_branch
      %803 = sbr.rel (0) target = $region73
    $region72: #{attn_decoder_forward.1} parent=1 // pred_region
      %804 = dma.done [#allocation6], 32
    $region73: #{attn_decoder_forward.1} parent=1 // pred_fallthru
      _
    %805 = vsyncpa [#allocation5], 1
    %806 = vsyncpa [#allocation8], 1
    %807 = vsyncpa [#allocation6], 1

</llo_original>
